<compile_context>
chip_gen: v6e
topology: v6e:2x2x1
jax: 0.10.0
libtpu: 0.0.40
codegen_flags: <defaults>
</compile_context>

<pallas_src>
import math

import jax
import jax.numpy as jnp
from jax.experimental import pallas as pl
from jax.experimental.pallas import tpu as pltpu


def _round_up(v: int, m: int) -> int:
    return ((v + m - 1) // m) * m


# ---------------------------------------------------------------------------
# Stage 1: support = X @ W   (computed exactly once, f32 MXU accumulation)
# ---------------------------------------------------------------------------
def _support_kernel(x_ref, w_ref, o_ref):
    o_ref[...] = jnp.dot(
        x_ref[...], w_ref[...], preferred_element_type=jnp.float32
    ).astype(o_ref.dtype)


def _compute_support(x, weight, tile_m, out_dtype):
    n, f_in = x.shape
    f_out = weight.shape[1]
    flops = 2 * n * f_in * f_out
    bytes_accessed = int(
        x.size * x.dtype.itemsize
        + weight.size * weight.dtype.itemsize
        + n * f_out * jnp.dtype(out_dtype).itemsize
    )
    return pl.pallas_call(
        _support_kernel,
        out_shape=jax.ShapeDtypeStruct((n, f_out), out_dtype),
        grid_spec=pl.GridSpec(
            grid=(n // tile_m,),
            in_specs=[
                pl.BlockSpec((tile_m, f_in), lambda i: (i, 0)),
                pl.BlockSpec((f_in, f_out), lambda i: (0, 0)),
            ],
            out_specs=pl.BlockSpec((tile_m, f_out), lambda i: (i, 0)),
        ),
        compiler_params=pltpu.CompilerParams(
            dimension_semantics=("parallel",),
        ),
        cost_estimate=pl.CostEstimate(
            flops=flops, transcendentals=0, bytes_accessed=bytes_accessed
        ),
    )(x, weight)


# ---------------------------------------------------------------------------
# Stage 2: out = adj @ support + bias   (K-tiled, f32 accumulator scratch)
# ---------------------------------------------------------------------------
def _aggregate_kernel(adj_ref, s_ref, b_ref, o_ref, acc_ref):
    k = pl.program_id(1)

    @pl.when(k == 0)
    def _():
        acc_ref[...] = jnp.zeros_like(acc_ref)

    acc_ref[...] += jnp.dot(
        adj_ref[...], s_ref[...], preferred_element_type=jnp.float32
    )

    @pl.when(k == pl.num_programs(1) - 1)
    def _():
        o_ref[...] = (acc_ref[...] + b_ref[...]).astype(o_ref.dtype)


def _aggregate(adj, support, bias2d, tile_m, tile_k, out_dtype):
    n = adj.shape[0]
    f_out = support.shape[1]
    flops = 2 * n * n * f_out
    bytes_accessed = int(
        adj.size * adj.dtype.itemsize
        + support.size * support.dtype.itemsize
        + bias2d.size * bias2d.dtype.itemsize
        + n * f_out * jnp.dtype(out_dtype).itemsize
    )
    return pl.pallas_call(
        _aggregate_kernel,
        out_shape=jax.ShapeDtypeStruct((n, f_out), out_dtype),
        grid_spec=pl.GridSpec(
            grid=(n // tile_m, n // tile_k),
            in_specs=[
                # adj row-block x K-block
                pl.BlockSpec((tile_m, tile_k), lambda i, k: (i, k)),
                # matching K-slice of support
                pl.BlockSpec((tile_k, f_out), lambda i, k: (k, 0)),
                # bias (tiny, kept resident)
                pl.BlockSpec((1, f_out), lambda i, k: (0, 0)),
            ],
            out_specs=pl.BlockSpec((tile_m, f_out), lambda i, k: (i, 0)),
            scratch_shapes=[pltpu.VMEM((tile_m, f_out), jnp.float32)],
        ),
        compiler_params=pltpu.CompilerParams(
            dimension_semantics=("parallel", "arbitrary"),
            vmem_limit_bytes=64 * 1024 * 1024,
        ),
        cost_estimate=pl.CostEstimate(
            flops=flops, transcendentals=0, bytes_accessed=bytes_accessed
        ),
    )(adj, support, bias2d)


# ---------------------------------------------------------------------------
# Public wrapper: GCN forward = adj @ (x @ weight) + bias
# ---------------------------------------------------------------------------
def graph_convolution(x, adj, weight, bias=None, *, compute_dtype=jnp.bfloat16):
    n, f_in = x.shape
    f_out = weight.shape[1]
    assert adj.shape == (n, n)
    out_dtype = x.dtype

    # Pad the node dimension so MXU-friendly tiles always divide it.  Zero
    # padded adj rows/cols contribute nothing; extra output rows are sliced.
    n_pad = _round_up(n, 128)
    if n_pad != n:
        x = jnp.pad(x, ((0, n_pad - n), (0, 0)))
        adj = jnp.pad(adj, ((0, n_pad - n), (0, n_pad - n)))

    # MXU-native row tile: 256 when it divides n_pad (v6e/v7x), else 128 (v5e
    # array size and the minimum lane-aligned tile).  K tile bounds VMEM.
    tile_m = 256 if n_pad % 256 == 0 else 128
    tile_k = next(t for t in (512, 256, 128) if n_pad % t == 0)

    # Stage 1: support computed once (not per row tile).
    support = _compute_support(x, weight, tile_m, compute_dtype)

    # Stage 2: bandwidth-bound aggregation with narrow operands, f32 accum.
    adj_c = adj.astype(compute_dtype)
    if bias is None:
        bias2d = jnp.zeros((1, f_out), dtype=jnp.float32)
    else:
        bias2d = bias.reshape(1, f_out).astype(jnp.float32)

    out = _aggregate(adj_c, support, bias2d, tile_m, tile_k, out_dtype)
    return out[:n]


def gcn_reference(x, adj, weight, bias):
    return adj @ (x @ weight) + bias[None, :]


if __name__ == "__main__":
    # Small, deterministic setup (matches GraphConvolution(F_IN, F_OUT)).
    N, F_IN, F_OUT = 128, 64, 128

    key = jax.random.PRNGKey(0)
    kx, kadj, kw, kb = jax.random.split(key, 4)

    x = jax.random.normal(kx, (N, F_IN), dtype=jnp.float32)

    # Dense symmetric-normalized "adjacency" (torch.spmm semantics == dense
    # matmul with a sparse-stored operand; values identical).
    a = (jax.random.uniform(kadj, (N, N)) > 0.9).astype(jnp.float32)
    a = jnp.clip(a + a.T + jnp.eye(N, dtype=jnp.float32), 0.0, 1.0)
    adj = a / jnp.sum(a, axis=1, keepdims=True)

    # Parameter init matching reset_parameters(): U(-stdv, stdv), stdv=1/sqrt(F_OUT)
    stdv = 1.0 / math.sqrt(F_OUT)
    weight = jax.random.uniform(
        kw, (F_IN, F_OUT), minval=-stdv, maxval=stdv, dtype=jnp.float32
    )
    bias = jax.random.uniform(
        kb, (F_OUT,), minval=-stdv, maxval=stdv, dtype=jnp.float32
    )

    out = graph_convolution(x, adj, weight, bias)
    out = jax.block_until_ready(out)

    assert out.shape == (N, F_OUT)
    ref = gcn_reference(x, adj, weight, bias)
    # Loose tolerance covers bf16 rounding of adj/support (accumulation is f32).
    assert jnp.allclose(out, ref, atol=2e-2, rtol=2e-2), (
        float(jnp.max(jnp.abs(out - ref)))
    )

    print("KERNEL_OK")
</pallas_src>

<mosaic_0001>
module attributes {stable_mosaic.version = 11 : i64} {
  func.func @_support_kernel(%arg0: i32, %arg1: memref<128x64xf32, #tpu.memory_space<vmem>>, %arg2: memref<64x128xf32, #tpu.memory_space<vmem>>, %arg3: memref<128x128xbf16, #tpu.memory_space<vmem>>) attributes {dimension_semantics = [#tpu.dimension_semantics<parallel>], iteration_bounds = array<i64: 1>, scalar_prefetch = 0 : i64, scratch_operands = 0 : i64, tpu.core_type = #tpu.core_type<tc>, window_params = [{transform_indices = @transform_0, window_bounds = array<i64: 128, 64>}, {pipeline_mode = #tpu.pipeline_mode<synchronous>, transform_indices = @transform_1, window_bounds = array<i64: 64, 128>}, {transform_indices = @transform_2, window_bounds = array<i64: 128, 128>}]} {
    %c0 = arith.constant 0 : index
    %c0_0 = arith.constant 0 : index
    %0 = vector.load %arg1[%c0, %c0_0] : memref<128x64xf32, #tpu.memory_space<vmem>>, vector<128x64xf32>
    %c0_1 = arith.constant 0 : index
    %c0_2 = arith.constant 0 : index
    %1 = vector.load %arg2[%c0_1, %c0_2] : memref<64x128xf32, #tpu.memory_space<vmem>>, vector<64x128xf32>
    %cst = arith.constant dense<0.000000e+00> : vector<128x128xf32>
    %2 = tpu.matmul %0, %1, %cst {dimension_numbers = #tpu.dot_dimension_numbers<[1], [0], [0], [1], [0, 0, 1, 1], [], []>} : vector<128x64xf32>, vector<64x128xf32>, vector<128x128xf32> -> vector<128x128xf32>
    %3 = arith.truncf %2 : vector<128x128xf32> to vector<128x128xbf16>
    %c0_3 = arith.constant 0 : index
    %c0_4 = arith.constant 0 : index
    %4 = vector.load %arg3[%c0_3, %c0_4] : memref<128x128xbf16, #tpu.memory_space<vmem>>, vector<128x128xbf16>
    tpu.vector_store %arg3[%c0_3, %c0_4], %3 {strides = array<i32>} : memref<128x128xbf16, #tpu.memory_space<vmem>>, vector<128x128xbf16>,
    return
  }
  func.func @transform_0(%arg0: i32) -> (i32, i32) {
    %c0_i32 = arith.constant 0 : i32
    %c0_i32_0 = arith.constant 0 : i32
    return %arg0, %c0_i32 : i32, i32
  }
  func.func @transform_1(%arg0: i32) -> (i32, i32) {
    %c0_i32 = arith.constant 0 : i32
    %c0_i32_0 = arith.constant 0 : i32
    %c0_i32_1 = arith.constant 0 : i32
    return %c0_i32, %c0_i32_0 : i32, i32
  }
  func.func @transform_2(%arg0: i32) -> (i32, i32) {
    %c0_i32 = arith.constant 0 : i32
    %c0_i32_0 = arith.constant 0 : i32
    return %arg0, %c0_i32 : i32, i32
  }
}

</mosaic_0001>

<llo_original>
// kernel: tpu_custom_call.1
$region0: #{tpu_custom_call.1}
  #allocation0 [shape = 'u32[]', space=smem, size = 0x4, offset = 0x4, fixed_abs, tag = 'smem constant byte address 0x4 - core index']
  #allocation1 [shape = 'u32[144,128]{1,0:T(1,128)}', space=vmem, size = 0x12000, scoped, tag = 'internal scratch']
  %s0 = inlined_call_operand.vmem [shape: f32[128,64], index: 0, kind: input, shape index: {}]
  %s1 = inlined_call_operand.vmem [shape: f32[64,128], index: 1, kind: input, shape index: {}]
  %s2 = inlined_call_operand.hbm [shape: bf16[128,128], index: 2, kind: output, shape index: {}]
  %s3 = sld [smem:[#allocation0]]
  $region18: #{tpu_custom_call.1} parent=0
    _
  %s5 = ssub.s32 1, %s3
  %s6 = scalar_select 0, %s5, %s3
  $region1: #{tpu_custom_call.1} parent=0
    #allocation2 [shape = 'u8[32768]{0}', space=vmem, size = 0x8000, scoped, tag = 'output window, operand 0, single buffered']
    #allocation3 [shape = 's32[1]{0}', space=sflag, size = 0x4, scoped, tag = 'scoped memory for tpu_custom_call.1']
    %7 = vsyncpa [#allocation3], 0
    // Predicated region
    $region2: #{tpu_custom_call.1} parent=1 // pred_check
      _
    $region3: #{tpu_custom_call.1} parent=1 // pred_check_branch
      %9 = sbr.rel (0) target = $region5
    $region4: #{tpu_custom_call.1} parent=1 // pred_region
      _
    $region5: #{tpu_custom_call.1} parent=1 // pred_fallthru
      _
    // Predicated region
    $region6: #{tpu_custom_call.1} parent=1 // pred_check
      _
    $region7: #{tpu_custom_call.1} parent=1 // pred_check_branch
      %11 = sbr.rel (0) target = $region9
    $region8: #{tpu_custom_call.1} parent=1 // pred_region
      _
    $region9: #{tpu_custom_call.1} parent=1 // pred_fallthru
      _
    %v12 = vld [vmem:[%s0] sm:$0xff]
    %v13 = vld [vmem:[%s0 + $0x8] sm:$0xff]
    %v14 = vld [vmem:[%s0 + $0x10] sm:$0xff]
    %v15 = vld [vmem:[%s0 + $0x18] sm:$0xff]
    %v16 = vld [vmem:[%s0 + $0x20] sm:$0xff]
    %v17 = vld [vmem:[%s0 + $0x28] sm:$0xff]
    %v18 = vld [vmem:[%s0 + $0x30] sm:$0xff]
    %v19 = vld [vmem:[%s0 + $0x38] sm:$0xff]
    %v20 = vld [vmem:[%s0 + $0x40] sm:$0xff]
    %v21 = vld [vmem:[%s0 + $0x48] sm:$0xff]
    %v22 = vld [vmem:[%s0 + $0x50] sm:$0xff]
    %v23 = vld [vmem:[%s0 + $0x58] sm:$0xff]
    %v24 = vld [vmem:[%s0 + $0x60] sm:$0xff]
    %v25 = vld [vmem:[%s0 + $0x68] sm:$0xff]
    %v26 = vld [vmem:[%s0 + $0x70] sm:$0xff]
    %v27 = vld [vmem:[%s0 + $0x78] sm:$0xff]
    %v28 = vld [vmem:[%s1] sm:$0xff]
    %v29 = vld [vmem:[%s1 + $0x8] sm:$0xff]
    %v30 = vld [vmem:[%s1 + $0x10] sm:$0xff]
    %v31 = vld [vmem:[%s1 + $0x18] sm:$0xff]
    %v32 = vld [vmem:[%s1 + $0x20] sm:$0xff]
    %v33 = vld [vmem:[%s1 + $0x28] sm:$0xff]
    %v34 = vld [vmem:[%s1 + $0x30] sm:$0xff]
    %v35 = vld [vmem:[%s1 + $0x38] sm:$0xff]
    %vm36 = vcmask 523264
    %v38 = vsel %vm36, %v12, 0
    %v41 = vsel %vm36, %v13, 0
    %v44 = vsel %vm36, %v14, 0
    %v47 = vsel %vm36, %v15, 0
    %v50 = vsel %vm36, %v16, 0
    %v53 = vsel %vm36, %v17, 0
    %v56 = vsel %vm36, %v18, 0
    %v59 = vsel %vm36, %v19, 0
    %v62 = vsel %vm36, %v20, 0
    %v65 = vsel %vm36, %v21, 0
    %v68 = vsel %vm36, %v22, 0
    %v71 = vsel %vm36, %v23, 0
    %v74 = vsel %vm36, %v24, 0
    %v77 = vsel %vm36, %v25, 0
    %v80 = vsel %vm36, %v26, 0
    %v83 = vsel %vm36, %v27, 0
    %85 = vmatprep.subr.mxu0 0.0
    %86 = vmatpush1.msra.mxu0 0.0
    %87 = vmatprep.subr.mxu0 0.0
    %88 = vmatpush1.msra.mxu0 0.0
    %89 = vmatprep.subr.mxu0 0.0
    %90 = vmatpush1.msra.mxu0 0.0
    %91 = vmatprep.subr.mxu0 0.0
    %92 = vmatpush1.msra.mxu0 0.0
    %93 = vmatprep.subr.mxu0 0.0
    %94 = vmatpush1.msra.mxu0 0.0
    %95 = vmatprep.subr.mxu0 0.0
    %96 = vmatpush1.msra.mxu0 0.0
    %97 = vmatprep.subr.mxu0 0.0
    %98 = vmatpush1.msra.mxu0 0.0
    %99 = vmatprep.subr.mxu0 0.0
    %100 = vmatpush1.msra.mxu0 0.0
    %101 = vmatprep.subr.mxu0 0.0
    %102 = vmatpush1.msra.mxu0 %v35
    %103 = vmatprep.subr.mxu0 0.0
    %104 = vmatpush1.msra.mxu0 %v34
    %105 = vmatprep.subr.mxu0 0.0
    %106 = vmatpush1.msra.mxu0 %v33
    %107 = vmatprep.subr.mxu0 0.0
    %108 = vmatpush1.msra.mxu0 %v32
    %109 = vmatprep.subr.mxu0 0.0
    %110 = vmatpush1.msra.mxu0 %v31
    %111 = vmatprep.subr.mxu0 0.0
    %112 = vmatpush1.msra.mxu0 %v30
    %113 = vmatprep.subr.mxu0 0.0
    %114 = vmatpush1.msra.mxu0 %v29
    %115 = vmatprep.subr.mxu0 0.0
    %116 = vmatpush1.msra.mxu0 %v28
    %117 = vmatprep.subr.mxu0 0.0
    %118 = vmatpush2.msra.mxu0 0.0
    %119 = vmatprep.subr.mxu0 0.0
    %120 = vmatpush2.msra.mxu0 0.0
    %121 = vmatprep.subr.mxu0 0.0
    %122 = vmatpush2.msra.mxu0 0.0
    %123 = vmatprep.subr.mxu0 0.0
    %124 = vmatpush2.msra.mxu0 0.0
    %125 = vmatprep.subr.mxu0 0.0
    %126 = vmatpush2.msra.mxu0 0.0
    %127 = vmatprep.subr.mxu0 0.0
    %128 = vmatpush2.msra.mxu0 0.0
    %129 = vmatprep.subr.mxu0 0.0
    %130 = vmatpush2.msra.mxu0 0.0
    %131 = vmatprep.subr.mxu0 0.0
    %132 = vmatpush2.msra.mxu0 0.0
    %133 = vmatprep.subr.mxu0 0.0
    %134 = vmatpush2.msra.mxu0 0.0
    %135 = vmatprep.subr.mxu0 0.0
    %136 = vmatpush2.msra.mxu0 0.0
    %137 = vmatprep.subr.mxu0 0.0
    %138 = vmatpush2.msra.mxu0 0.0
    %139 = vmatprep.subr.mxu0 0.0
    %140 = vmatpush2.msra.mxu0 0.0
    %141 = vmatprep.subr.mxu0 0.0
    %142 = vmatpush2.msra.mxu0 0.0
    %143 = vmatprep.subr.mxu0 0.0
    %144 = vmatpush2.msra.mxu0 0.0
    %145 = vmatprep.subr.mxu0 0.0
    %146 = vmatpush2.msra.mxu0 0.0
    %147 = vmatprep.subr.mxu0 0.0
    %148 = vmatpush2.msra.mxu0 0.0
    %149 = vmatprep.mubr.f32.mxu0 0.0
    %150 = vmatmul.mubr.f32.gmra.mxu0 %v38
    %v151 = vpop.f32.mrf.mxu0
    %v152 = vadd.f32 0.0, %v151
    %v153 = vpop.f32.mrf.mxu0
    %154 = vmatprep.mubr.f32.mxu0 0.0
    %155 = vmatmul.mubr.f32.gmra.mxu0 %v41
    %v156 = vpop.f32.mrf.mxu0
    %v157 = vadd.f32 0.0, %v156
    %v158 = vpop.f32.mrf.mxu0
    %159 = vmatprep.mubr.f32.mxu0 0.0
    %160 = vmatmul.mubr.f32.gmra.mxu0 %v44
    %v161 = vpop.f32.mrf.mxu0
    %v162 = vadd.f32 0.0, %v161
    %v163 = vpop.f32.mrf.mxu0
    %164 = vmatprep.mubr.f32.mxu0 0.0
    %165 = vmatmul.mubr.f32.gmra.mxu0 %v47
    %v166 = vpop.f32.mrf.mxu0
    %v167 = vadd.f32 0.0, %v166
    %v168 = vpop.f32.mrf.mxu0
    %169 = vmatprep.mubr.f32.mxu0 0.0
    %170 = vmatmul.mubr.f32.gmra.mxu0 %v50
    %v171 = vpop.f32.mrf.mxu0
    %v172 = vadd.f32 0.0, %v171
    %v173 = vpop.f32.mrf.mxu0
    %174 = vmatprep.mubr.f32.mxu0 0.0
    %175 = vmatmul.mubr.f32.gmra.mxu0 %v53
    %v176 = vpop.f32.mrf.mxu0
    %v177 = vadd.f32 0.0, %v176
    %v178 = vpop.f32.mrf.mxu0
    %179 = vmatprep.mubr.f32.mxu0 0.0
    %180 = vmatmul.mubr.f32.gmra.mxu0 %v56
    %v181 = vpop.f32.mrf.mxu0
    %v182 = vadd.f32 0.0, %v181
    %v183 = vpop.f32.mrf.mxu0
    %184 = vmatprep.mubr.f32.mxu0 0.0
    %185 = vmatmul.mubr.f32.gmra.mxu0 %v59
    %v186 = vpop.f32.mrf.mxu0
    %v187 = vadd.f32 0.0, %v186
    %v188 = vpop.f32.mrf.mxu0
    %189 = vmatprep.mubr.f32.mxu0 0.0
    %190 = vmatmul.mubr.f32.gmra.mxu0 %v62
    %v191 = vpop.f32.mrf.mxu0
    %v192 = vadd.f32 0.0, %v191
    %v193 = vpop.f32.mrf.mxu0
    %194 = vmatprep.mubr.f32.mxu0 0.0
    %195 = vmatmul.mubr.f32.gmra.mxu0 %v65
    %v196 = vpop.f32.mrf.mxu0
    %v197 = vadd.f32 0.0, %v196
    %v198 = vpop.f32.mrf.mxu0
    %199 = vmatprep.mubr.f32.mxu0 0.0
    %200 = vmatmul.mubr.f32.gmra.mxu0 %v68
    %v201 = vpop.f32.mrf.mxu0
    %v202 = vadd.f32 0.0, %v201
    %v203 = vpop.f32.mrf.mxu0
    %204 = vmatprep.mubr.f32.mxu0 0.0
    %205 = vmatmul.mubr.f32.gmra.mxu0 %v71
    %v206 = vpop.f32.mrf.mxu0
    %v207 = vadd.f32 0.0, %v206
    %v208 = vpop.f32.mrf.mxu0
    %209 = vmatprep.mubr.f32.mxu0 0.0
    %210 = vmatmul.mubr.f32.gmra.mxu0 %v74
    %v211 = vpop.f32.mrf.mxu0
    %v212 = vadd.f32 0.0, %v211
    %v213 = vpop.f32.mrf.mxu0
    %214 = vmatprep.mubr.f32.mxu0 0.0
    %215 = vmatmul.mubr.f32.gmra.mxu0 %v77
    %v216 = vpop.f32.mrf.mxu0
    %v217 = vadd.f32 0.0, %v216
    %v218 = vpop.f32.mrf.mxu0
    %219 = vmatprep.mubr.f32.mxu0 0.0
    %220 = vmatmul.mubr.f32.gmra.mxu0 %v80
    %v221 = vpop.f32.mrf.mxu0
    %v222 = vadd.f32 0.0, %v221
    %v223 = vpop.f32.mrf.mxu0
    %224 = vmatprep.mubr.f32.mxu0 0.0
    %225 = vmatmul.mubr.f32.gmra.mxu0 %v83
    %v226 = vpop.f32.mrf.mxu0
    %v227 = vadd.f32 0.0, %v226
    %v228 = vpop.f32.mrf.mxu0
    %229 = vdwg.mxu0
    %v230 = vpack.c.bf16 %v157, %v152
    %v231 = vpack.c.bf16 %v167, %v162
    %v232 = vpack.c.bf16 %v177, %v172
    %v233 = vpack.c.bf16 %v187, %v182
    %v234 = vpack.c.bf16 %v197, %v192
    %v235 = vpack.c.bf16 %v207, %v202
    %v236 = vpack.c.bf16 %v217, %v212
    %v237 = vpack.c.bf16 %v227, %v222
    %v246 = vunpack.c.l.b16 %v230
    %v247 = vunpack.c.h.b16 %v230
    %v248 = vunpack.c.l.b16 %v231
    %v249 = vunpack.c.h.b16 %v231
    %v250 = vunpack.c.l.b16 %v232
    %v251 = vunpack.c.h.b16 %v232
    %v252 = vunpack.c.l.b16 %v233
    %v253 = vunpack.c.h.b16 %v233
    %v254 = vunpack.c.l.b16 %v234
    %v255 = vunpack.c.h.b16 %v234
    %v256 = vunpack.c.l.b16 %v235
    %v257 = vunpack.c.h.b16 %v235
    %v258 = vunpack.c.l.b16 %v236
    %v259 = vunpack.c.h.b16 %v236
    %v260 = vunpack.c.l.b16 %v237
    %v261 = vunpack.c.h.b16 %v237
    %v262 = vpack.c.b16 %v246, %v246
    %v263 = vpack.c.b16 %v247, %v247
    %v264 = vpack.c.b16 %v248, %v248
    %v265 = vpack.c.b16 %v249, %v249
    %v266 = vpack.c.b16 %v250, %v250
    %v267 = vpack.c.b16 %v251, %v251
    %v268 = vpack.c.b16 %v252, %v252
    %v269 = vpack.c.b16 %v253, %v253
    %v270 = vpack.c.b16 %v254, %v254
    %v271 = vpack.c.b16 %v255, %v255
    %v272 = vpack.c.b16 %v256, %v256
    %v273 = vpack.c.b16 %v257, %v257
    %v274 = vpack.c.b16 %v258, %v258
    %v275 = vpack.c.b16 %v259, %v259
    %v276 = vpack.c.b16 %v260, %v260
    %v277 = vpack.c.b16 %v261, %v261
    %294 = vst [vmem:[#allocation2] sm:$0xf] %v262
    %295 = vst [vmem:[#allocation2 + $0x4] sm:$0xf] %v263
    %296 = vst [vmem:[#allocation2 + $0x8] sm:$0xf] %v264
    %297 = vst [vmem:[#allocation2 + $0xc] sm:$0xf] %v265
    %298 = vst [vmem:[#allocation2 + $0x10] sm:$0xf] %v266
    %299 = vst [vmem:[#allocation2 + $0x14] sm:$0xf] %v267
    %300 = vst [vmem:[#allocation2 + $0x18] sm:$0xf] %v268
    %301 = vst [vmem:[#allocation2 + $0x1c] sm:$0xf] %v269
    %302 = vst [vmem:[#allocation2 + $0x20] sm:$0xf] %v270
    %303 = vst [vmem:[#allocation2 + $0x24] sm:$0xf] %v271
    %304 = vst [vmem:[#allocation2 + $0x28] sm:$0xf] %v272
    %305 = vst [vmem:[#allocation2 + $0x2c] sm:$0xf] %v273
    %306 = vst [vmem:[#allocation2 + $0x30] sm:$0xf] %v274
    %307 = vst [vmem:[#allocation2 + $0x34] sm:$0xf] %v275
    %308 = vst [vmem:[#allocation2 + $0x38] sm:$0xf] %v276
    %309 = vst [vmem:[#allocation2 + $0x3c] sm:$0xf] %v277
    // Predicated region
    $region10: #{tpu_custom_call.1} parent=1 // pred_check
      _
    $region11: #{tpu_custom_call.1} parent=1 // pred_check_branch
      %311 = sbr.rel (0) target = $region13
    $region12: #{tpu_custom_call.1} parent=1 // pred_region
      %s313 = ssub.s32 1024, 1024
      %314 = vsyncadd [#allocation3], %s313
      %s315 = sshll.u32 [#allocation2], 4
      %s316 = int_to_ptr.vmem [resolvable:$true] %s315
      %321 = dma.vmem_to_hbm [thread:$0]  %s316, 1024, %s2, [#allocation3], 64, 64, 4
    $region13: #{tpu_custom_call.1} parent=1 // pred_fallthru
      _
    // Predicated region
    $region14: #{tpu_custom_call.1} parent=1 // pred_check
      _
    $region15: #{tpu_custom_call.1} parent=1 // pred_check_branch
      %323 = sbr.rel (0) target = $region17
    $region16: #{tpu_custom_call.1} parent=1 // pred_region
      %324 = dma.done [#allocation3], 1024
    $region17: #{tpu_custom_call.1} parent=1 // pred_fallthru
      _
    %325 = vsyncpa [#allocation3], 1

</llo_original>
